<compile_context>
chip_gen: v7x
topology: tpu7x:2x2x1
jax: 0.10.0
libtpu: 0.0.40
codegen_flags: <defaults>
</compile_context>

<pallas_src>
import functools

import jax
import jax.numpy as jnp
from jax import lax
from jax.experimental import pallas as pl
from jax.experimental.pallas import tpu as pltpu

_BN_EPS = 1e-5
_ACC_VREGS = 8          # fp32 vregs allowed for the per-chunk register accumulator


# ----------------------------------------------------------------------------
# Generation-aware budgets / tile heuristics
# ----------------------------------------------------------------------------
def _vmem_limit_bytes():
    """~75% of the per-core VMEM of the current generation, clamped."""
    try:
        cap = int(pltpu.get_tpu_info().vmem_capacity_bytes)
    except Exception:
        cap = 64 * 1024 * 1024               # conservative (v7x per-TensorCore)
    return max(32 * 1024 * 1024, min((cap * 3) // 4, 96 * 1024 * 1024))


def _pick_hw_tile(hw, c, itemsize, budget_bytes):
    """h*w tile for the pooled reduction: whole extent if it fits, else the
    largest 128-multiple within budget, preferring exact divisors of hw so
    the ragged-tail mask never runs."""
    if hw * c * itemsize <= budget_bytes:
        return hw
    max_tile = (budget_bytes // (c * itemsize)) // 128 * 128
    max_tile = max(128, min(max_tile, (hw // 128) * 128))
    for t in range(max_tile, 127, -128):      # prefer a divisor (no ragged tail)
        if hw % t == 0:
            return t
    return max_tile


def _pick_c_tile(c, per_channel_bytes, budget_bytes):
    """Channel tile for the depthwise conv: c itself when affordable (or when
    c < 128, where lane tiling is impossible), else the largest 128-multiple
    divisor of c that fits the budget (keeps blocks lane-dense)."""
    if c * per_channel_bytes <= budget_bytes or c < 128:
        return c
    limit = max(128, (budget_bytes // per_channel_bytes) // 128 * 128)
    best = None
    t = 128
    while t <= min(c, limit):
        if c % t == 0:
            best = t
        t += 128
    if best is not None:
        return best
    return 128 if c % 128 == 0 else c


# ----------------------------------------------------------------------------
# Kernel 1: tiled global-avg-pool + (BN-folded) dynamic weight generation
#   grid = (b, n_hw_tiles)   -- ("parallel", "arbitrary")
# ----------------------------------------------------------------------------
def _weight_gen_kernel(x_ref, w1t_ref, b1_ref, w2t_ref, b2_ref, out_ref,
                       acc_ref, *, hw, hw_tile, n_hw_tiles, inv_hw):
    t = pl.program_id(1)

    @pl.when(t == 0)
    def _():
        acc_ref[...] = jnp.zeros_like(acc_ref)

    xv = x_ref[...].astype(jnp.float32)                  # (1, hw_tile, c)

    if hw % hw_tile == 0:
        acc_ref[...] += jnp.sum(xv, axis=1)
    else:
        # Only the last tile is ragged -> mask only there.
        @pl.when(t < n_hw_tiles - 1)
        def _():
            acc_ref[...] += jnp.sum(xv, axis=1)

        @pl.when(t == n_hw_tiles - 1)
        def _():
            rem = hw - (n_hw_tiles - 1) * hw_tile        # static python int
            pos = lax.broadcasted_iota(jnp.int32, xv.shape, 1)
            acc_ref[...] += jnp.sum(jnp.where(pos < rem, xv, 0.0), axis=1)

    @pl.when(t == n_hw_tiles - 1)
    def _():
        pooled = acc_ref[...] * inv_hw                   # (1, c) global avg pool
        # conv1 (1x1) with BatchNorm folded in, then ReLU
        y = jnp.dot(pooled, w1t_ref[...],
                    preferred_element_type=jnp.float32) + b1_ref[...]
        y = jnp.maximum(y, 0.0)
        # conv2 (1x1) with bias; columns pre-permuted to tap-major (k*k, c)
        y = jnp.dot(y, w2t_ref[...],
                    preferred_element_type=jnp.float32) + b2_ref[...]
        out_ref[...] = y[:, None, :].astype(out_ref.dtype)   # (1, 1, k*k*c)


# ----------------------------------------------------------------------------
# Kernel 2: per-sample depthwise conv, channels-last (channels on lanes)
#   grid = (b, n_channel_tiles)   -- ("parallel", "parallel")
# ----------------------------------------------------------------------------
def _dyn_dwconv_kernel(x_ref, w_ref, bias_ref, out_ref, xp_ref, *,
                       k, stride, pad, h, w, out_h, out_w, row_chunk):
    # x_ref   : (1, h, w, c_t)    NHWC input block
    # w_ref   : (1, k*k, c_t)     per-sample dynamic weights, tap-major
    # bias_ref: (1, c_t)          static per-channel bias
    # out_ref : (1, oh, ow, c_t)
    # xp_ref  : (h+2p, w+2p, c_t) zero-halo staging buffer (input dtype)
    c_t = x_ref.shape[-1]
    hp, wp = h + 2 * pad, w + 2 * pad
    ow1 = wp - k + 1                                   # stride-1 output width

    # ---- stage input block; zero only the 4 halo strips ----------------------
    if pad > 0:
        xp_ref[0:pad, :, :] = jnp.zeros((pad, wp, c_t), xp_ref.dtype)
        xp_ref[hp - pad:hp, :, :] = jnp.zeros((pad, wp, c_t), xp_ref.dtype)
        xp_ref[pad:pad + h, 0:pad, :] = jnp.zeros((h, pad, c_t), xp_ref.dtype)
        xp_ref[pad:pad + h, pad + w:wp, :] = jnp.zeros((h, pad, c_t), xp_ref.dtype)
        xp_ref[pad:pad + h, pad:pad + w, :] = x_ref[0]
    else:
        xp_ref[...] = x_ref[0]

    wts = w_ref[0].astype(jnp.float32)                 # (k*k, c_t)
    bias = bias_ref[0].astype(jnp.float32)             # (c_t,)

    # ---- k*k-tap MAC, register accumulation over output-row chunks -----------
    for r0 in range(0, out_h, row_chunk):              # static chunk loop
        rows = min(row_chunk, out_h - r0)
        span = (rows - 1) * stride + 1                 # stride-1 rows needed
        base = r0 * stride
        acc = None
        for p in range(k):                             # static k*k tap loop
            for q in range(k):
                patch = xp_ref[base + p:base + p + span,
                               q:q + ow1, :].astype(jnp.float32)
                term = patch * wts[p * k + q]          # lane-wise (c_t) weight
                acc = term if acc is None else acc + term
        if stride > 1:
            acc = lax.slice(acc, (0, 0, 0),
                            ((rows - 1) * stride + 1,
                             (out_w - 1) * stride + 1, c_t),
                            (stride, stride, 1))
        acc = acc + bias                               # bias folded into store
        out_ref[:, r0:r0 + rows, :, :] = acc[None].astype(out_ref.dtype)


# ----------------------------------------------------------------------------
# Wrapper
# ----------------------------------------------------------------------------
def dynamic_dw_conv(x, params, *, kernel_size=3, stride=1, padding=1,
                    reduction=4):
    b, c, h, w = x.shape
    k = kernel_size
    kk = k * k
    c_red = c // reduction
    hw = h * w
    pad = padding

    vmem_limit = _vmem_limit_bytes()

    # ---- host-side parameter prep --------------------------------------------
    # Fold BatchNorm (eval semantics) into conv1; pre-transpose both 1x1
    # weights; permute conv2 outputs to tap-major so kernel 1 emits (k*k, c).
    scale = params["gamma"] / jnp.sqrt(params["running_var"] + _BN_EPS)   # (1, c_red)
    w1_eff = params["w1"] * scale.reshape(c_red, 1)                       # (c_red, c)
    b1_eff = (params["beta"] - params["running_mean"] * scale).reshape(1, c_red)
    w1t = jnp.transpose(w1_eff)                                           # (c, c_red)
    w2_tap = params["w2"].reshape(c, kk, c_red).transpose(1, 0, 2)        # (kk, c, c_red)
    w2t = jnp.transpose(w2_tap.reshape(kk * c, c_red))                    # (c_red, kk*c)
    b2 = params["b2"].reshape(c, kk).transpose(1, 0).reshape(1, kk * c)
    bias_row = params["bias"].reshape(1, c)

    # ---- channels-last activation layout (lane-dense inside the kernels) -----
    x_nhwc = jnp.transpose(x, (0, 2, 3, 1))             # (b, h, w, c)
    x_flat = x_nhwc.reshape(b, hw, c)                   # free contiguous reshape

    # ---- Kernel 1: tiled pooled reduction + dynamic-weight generation --------
    hw_tile = _pick_hw_tile(hw, c, x.dtype.itemsize, vmem_limit // 4)
    n_t = pl.cdiv(hw, hw_tile)

    wg_kernel = functools.partial(_weight_gen_kernel, hw=hw, hw_tile=hw_tile,
                                  n_hw_tiles=n_t, inv_hw=1.0 / float(hw))
    wdyn = pl.pallas_call(
        wg_kernel,
        out_shape=jax.ShapeDtypeStruct((b, 1, kk * c), jnp.float32),
        grid=(b, n_t),
        in_specs=[
            pl.BlockSpec((1, hw_tile, c), lambda i, t: (i, t, 0)),
            pl.BlockSpec((c, c_red), lambda i, t: (0, 0)),      # resident weights
            pl.BlockSpec((1, c_red), lambda i, t: (0, 0)),
            pl.BlockSpec((c_red, kk * c), lambda i, t: (0, 0)),
            pl.BlockSpec((1, kk * c), lambda i, t: (0, 0)),
        ],
        out_specs=pl.BlockSpec((1, 1, kk * c), lambda i, t: (i, 0, 0)),
        scratch_shapes=[pltpu.VMEM((1, c), jnp.float32)],
        compiler_params=pltpu.CompilerParams(
            dimension_semantics=("parallel", "arbitrary"),
            vmem_limit_bytes=vmem_limit),
    )(x_flat, w1t, b1_eff, w2t, b2)
    wdyn = wdyn.reshape(b, kk, c)          # tap-major, channels last (free)

    # ---- Kernel 2: per-sample depthwise conv (channels-last) -----------------
    hp, wp = h + 2 * pad, w + 2 * pad
    out_h = (hp - k) // stride + 1
    out_w = (wp - k) // stride + 1
    ow1 = wp - k + 1

    itemsize = x.dtype.itemsize
    per_ch = (2 * h * w + 2 * out_h * out_w + hp * wp) * itemsize
    c_tile = _pick_c_tile(c, per_ch, vmem_limit // 2)
    n_ct = c // c_tile

    # Size the register accumulator so ~_ACC_VREGS fp32 vregs stay live.
    vregs_per_row = ((ow1 + 7) // 8) * ((c_tile + 127) // 128)
    span_budget = max(1, _ACC_VREGS // vregs_per_row)
    row_chunk = max(1, (span_budget - 1) // stride + 1)

    conv_kernel = functools.partial(
        _dyn_dwconv_kernel, k=k, stride=stride, pad=pad, h=h, w=w,
        out_h=out_h, out_w=out_w, row_chunk=row_chunk)
    out_nhwc = pl.pallas_call(
        conv_kernel,
        out_shape=jax.ShapeDtypeStruct((b, out_h, out_w, c), x.dtype),
        grid=(b, n_ct),
        in_specs=[
            pl.BlockSpec((1, h, w, c_tile), lambda i, j: (i, 0, 0, j)),
            pl.BlockSpec((1, kk, c_tile), lambda i, j: (i, 0, j)),
            pl.BlockSpec((1, c_tile), lambda i, j: (0, j)),
        ],
        out_specs=pl.BlockSpec((1, out_h, out_w, c_tile),
                               lambda i, j: (i, 0, 0, j)),
        scratch_shapes=[pltpu.VMEM((hp, wp, c_tile), x.dtype)],
        compiler_params=pltpu.CompilerParams(
            dimension_semantics=("parallel", "parallel"),
            vmem_limit_bytes=vmem_limit),
    )(x_nhwc, wdyn, bias_row)

    return jnp.transpose(out_nhwc, (0, 3, 1, 2))        # back to NCHW


# ----------------------------------------------------------------------------
# Pure-JAX reference (for verification)
# ----------------------------------------------------------------------------
def _reference(x, params, *, kernel_size=3, stride=1, padding=1, reduction=4):
    b, c, h, w = x.shape
    k = kernel_size
    pooled = jnp.mean(x, axis=(2, 3))                              # (b, c)
    y = pooled @ params["w1"].T
    y = (y - params["running_mean"]) / jnp.sqrt(params["running_var"] + _BN_EPS)
    y = y * params["gamma"] + params["beta"]
    y = jnp.maximum(y, 0.0)
    wdyn = y @ params["w2"].T + params["b2"]                       # (b, c*k*k)
    wdyn = wdyn.reshape(b * c, 1, k, k)
    xr = x.reshape(1, b * c, h, w)
    out = lax.conv_general_dilated(
        xr, wdyn, (stride, stride), [(padding, padding), (padding, padding)],
        feature_group_count=b * c,
        dimension_numbers=("NCHW", "OIHW", "NCHW"))
    out = out.reshape(b, c, out.shape[-2], out.shape[-1])
    return out + params["bias"][None, :, None, None]


if __name__ == "__main__":
    # small shapes consistent with the module: b=2, dim=8, h=w=16, k=3,
    # stride=1, padding=1, reduction=4, groups=dim (depthwise).
    B, DIM, H, W = 2, 8, 16, 16
    K, STRIDE, PAD, RED = 3, 1, 1, 4
    C_RED = DIM // RED

    key = jax.random.PRNGKey(0)
    kx, k1, k2, k3 = jax.random.split(key, 4)

    x = jax.random.normal(kx, (B, DIM, H, W), dtype=jnp.float32)

    params = {
        # conv1 weight (dim//r, dim, 1, 1) -> stored (dim//r, dim)
        "w1": 0.1 * jax.random.normal(k1, (C_RED, DIM), dtype=jnp.float32),
        # BatchNorm2d(dim//r) params / running stats (defaults)
        "gamma": jnp.ones((1, C_RED), jnp.float32),
        "beta": jnp.zeros((1, C_RED), jnp.float32),
        "running_mean": jnp.zeros((1, C_RED), jnp.float32),
        "running_var": jnp.ones((1, C_RED), jnp.float32),
        # conv2 weight (dim*k*k, dim//r, 1, 1) -> stored (dim*k*k, dim//r), + bias
        "w2": 0.1 * jax.random.normal(k2, (DIM * K * K, C_RED), dtype=jnp.float32),
        "b2": 0.05 * jax.random.normal(k3, (1, DIM * K * K), dtype=jnp.float32),
        # module bias parameter: torch.zeros(dim)
        "bias": jnp.zeros((DIM,), jnp.float32),
    }

    out = dynamic_dw_conv(x, params, kernel_size=K, stride=STRIDE,
                          padding=PAD, reduction=RED)
    out = jax.block_until_ready(out)

    ref = _reference(x, params, kernel_size=K, stride=STRIDE,
                     padding=PAD, reduction=RED)
    assert out.shape == (B, DIM, H, W), out.shape
    assert jnp.allclose(out, ref, atol=1e-4, rtol=1e-4), \
        float(jnp.max(jnp.abs(out - ref)))

    print("KERNEL_OK")
</pallas_src>

<mosaic_0001>
module attributes {stable_mosaic.version = 11 : i64} {
  func.func @_weight_gen_kernel(%arg0: i32, %arg1: i32, %arg2: memref<1x256x8xf32, #tpu.memory_space<vmem>>, %arg3: memref<8x2xf32, #tpu.memory_space<vmem>>, %arg4: memref<1x2xf32, #tpu.memory_space<vmem>>, %arg5: memref<2x72xf32, #tpu.memory_space<vmem>>, %arg6: memref<1x72xf32, #tpu.memory_space<vmem>>, %arg7: memref<1x1x72xf32, #tpu.memory_space<vmem>>, %arg8: memref<1x8xf32, #tpu.memory_space<vmem>>) attributes {dimension_semantics = [#tpu.dimension_semantics<parallel>, #tpu.dimension_semantics<arbitrary>], iteration_bounds = array<i64: 2, 1>, scalar_prefetch = 0 : i64, scratch_operands = 1 : i64, tpu.core_type = #tpu.core_type<tc>, window_params = [{transform_indices = @transform_0, window_bounds = array<i64: 1, 256, 8>}, {pipeline_mode = #tpu.pipeline_mode<synchronous>, transform_indices = @transform_1, window_bounds = array<i64: 8, 2>}, {pipeline_mode = #tpu.pipeline_mode<synchronous>, transform_indices = @transform_2, window_bounds = array<i64: 1, 2>}, {pipeline_mode = #tpu.pipeline_mode<synchronous>, transform_indices = @transform_3, window_bounds = array<i64: 2, 72>}, {pipeline_mode = #tpu.pipeline_mode<synchronous>, transform_indices = @transform_4, window_bounds = array<i64: 1, 72>}, {transform_indices = @transform_5, window_bounds = array<i64: 1, 1, 72>}]} {
    %c0_i32 = arith.constant 0 : i32
    %0 = arith.cmpi eq, %arg1, %c0_i32 : i32
    %1 = arith.extui %0 : i1 to i32
    %c0_i32_0 = arith.constant 0 : i32
    %2 = arith.cmpi ne, %1, %c0_i32_0 : i32
    scf.if %2 {
      %cst_9 = arith.constant 0.000000e+00 : f32
      %11 = vector.broadcast %cst_9 : f32 to vector<1x8xf32>
      %c0_10 = arith.constant 0 : index
      %c0_11 = arith.constant 0 : index
      %12 = vector.load %arg8[%c0_10, %c0_11] : memref<1x8xf32, #tpu.memory_space<vmem>>, vector<1x8xf32>
      tpu.vector_store %arg8[%c0_10, %c0_11], %11 {strides = array<i32>} : memref<1x8xf32, #tpu.memory_space<vmem>>, vector<1x8xf32>,
    } else {
    }
    %c0 = arith.constant 0 : index
    %c0_1 = arith.constant 0 : index
    %c0_2 = arith.constant 0 : index
    %3 = vector.load %arg2[%c0, %c0_1, %c0_2] : memref<1x256x8xf32, #tpu.memory_space<vmem>>, vector<1x256x8xf32>
    %c0_3 = arith.constant 0 : index
    %c0_4 = arith.constant 0 : index
    %4 = vector.load %arg8[%c0_3, %c0_4] : memref<1x8xf32, #tpu.memory_space<vmem>>, vector<1x8xf32>
    %cst = arith.constant dense<0.000000e+00> : vector<1x8xf32>
    %5 = vector.multi_reduction <add>, %3, %cst [1] : vector<1x256x8xf32> to vector<1x8xf32>
    %6 = arith.addf %4, %5 : vector<1x8xf32>
    %c0_5 = arith.constant 0 : index
    %c0_6 = arith.constant 0 : index
    %7 = vector.load %arg8[%c0_5, %c0_6] : memref<1x8xf32, #tpu.memory_space<vmem>>, vector<1x8xf32>
    tpu.vector_store %arg8[%c0_5, %c0_6], %6 {strides = array<i32>} : memref<1x8xf32, #tpu.memory_space<vmem>>, vector<1x8xf32>,
    %c0_i32_7 = arith.constant 0 : i32
    %8 = arith.cmpi eq, %arg1, %c0_i32_7 : i32
    %9 = arith.extui %8 : i1 to i32
    %c0_i32_8 = arith.constant 0 : i32
    %10 = arith.cmpi ne, %9, %c0_i32_8 : i32
    scf.if %10 {
      %c0_9 = arith.constant 0 : index
      %c0_10 = arith.constant 0 : index
      %11 = vector.load %arg8[%c0_9, %c0_10] : memref<1x8xf32, #tpu.memory_space<vmem>>, vector<1x8xf32>
      %cst_11 = arith.constant 3.906250e-03 : f32
      %12 = vector.broadcast %cst_11 : f32 to vector<1x8xf32>
      %13 = arith.mulf %11, %12 : vector<1x8xf32>
      %c0_12 = arith.constant 0 : index
      %c0_13 = arith.constant 0 : index
      %14 = vector.load %arg3[%c0_12, %c0_13] : memref<8x2xf32, #tpu.memory_space<vmem>>, vector<8x2xf32>
      %cst_14 = arith.constant dense<0.000000e+00> : vector<1x2xf32>
      %15 = tpu.matmul %13, %14, %cst_14 {dimension_numbers = #tpu.dot_dimension_numbers<[1], [0], [0], [1], [0, 0, 1, 1], [], []>} : vector<1x8xf32>, vector<8x2xf32>, vector<1x2xf32> -> vector<1x2xf32>
      %c0_15 = arith.constant 0 : index
      %c0_16 = arith.constant 0 : index
      %16 = vector.load %arg4[%c0_15, %c0_16] : memref<1x2xf32, #tpu.memory_space<vmem>>, vector<1x2xf32>
      %17 = arith.addf %15, %16 : vector<1x2xf32>
      %cst_17 = arith.constant 0.000000e+00 : f32
      %18 = vector.broadcast %cst_17 : f32 to vector<1x2xf32>
      %19 = arith.maximumf %17, %18 : vector<1x2xf32>
      %c0_18 = arith.constant 0 : index
      %c0_19 = arith.constant 0 : index
      %20 = vector.load %arg5[%c0_18, %c0_19] : memref<2x72xf32, #tpu.memory_space<vmem>>, vector<2x72xf32>
      %cst_20 = arith.constant dense<0.000000e+00> : vector<1x72xf32>
      %21 = tpu.matmul %19, %20, %cst_20 {dimension_numbers = #tpu.dot_dimension_numbers<[1], [0], [0], [1], [0, 0, 1, 1], [], []>} : vector<1x2xf32>, vector<2x72xf32>, vector<1x72xf32> -> vector<1x72xf32>
      %c0_21 = arith.constant 0 : index
      %c0_22 = arith.constant 0 : index
      %22 = vector.load %arg6[%c0_21, %c0_22] : memref<1x72xf32, #tpu.memory_space<vmem>>, vector<1x72xf32>
      %23 = arith.addf %21, %22 : vector<1x72xf32>
      %24 = vector.shape_cast %23 : vector<1x72xf32> to vector<1x1x72xf32>
      %c0_23 = arith.constant 0 : index
      %c0_24 = arith.constant 0 : index
      %c0_25 = arith.constant 0 : index
      %25 = vector.load %arg7[%c0_23, %c0_24, %c0_25] : memref<1x1x72xf32, #tpu.memory_space<vmem>>, vector<1x1x72xf32>
      tpu.vector_store %arg7[%c0_23, %c0_24, %c0_25], %24 {strides = array<i32>} : memref<1x1x72xf32, #tpu.memory_space<vmem>>, vector<1x1x72xf32>,
    } else {
    }
    return
  }
  func.func @transform_0(%arg0: i32, %arg1: i32) -> (i32, i32, i32) {
    %c0_i32 = arith.constant 0 : i32
    %c0_i32_0 = arith.constant 0 : i32
    return %arg0, %arg1, %c0_i32 : i32, i32, i32
  }
  func.func @transform_1(%arg0: i32, %arg1: i32) -> (i32, i32) {
    %c0_i32 = arith.constant 0 : i32
    %c0_i32_0 = arith.constant 0 : i32
    %c0_i32_1 = arith.constant 0 : i32
    return %c0_i32, %c0_i32_0 : i32, i32
  }
  func.func @transform_2(%arg0: i32, %arg1: i32) -> (i32, i32) {
    %c0_i32 = arith.constant 0 : i32
    %c0_i32_0 = arith.constant 0 : i32
    %c0_i32_1 = arith.constant 0 : i32
    return %c0_i32, %c0_i32_0 : i32, i32
  }
  func.func @transform_3(%arg0: i32, %arg1: i32) -> (i32, i32) {
    %c0_i32 = arith.constant 0 : i32
    %c0_i32_0 = arith.constant 0 : i32
    %c0_i32_1 = arith.constant 0 : i32
    return %c0_i32, %c0_i32_0 : i32, i32
  }
  func.func @transform_4(%arg0: i32, %arg1: i32) -> (i32, i32) {
    %c0_i32 = arith.constant 0 : i32
    %c0_i32_0 = arith.constant 0 : i32
    %c0_i32_1 = arith.constant 0 : i32
    return %c0_i32, %c0_i32_0 : i32, i32
  }
  func.func @transform_5(%arg0: i32, %arg1: i32) -> (i32, i32, i32) {
    %c0_i32 = arith.constant 0 : i32
    %c0_i32_0 = arith.constant 0 : i32
    %c0_i32_1 = arith.constant 0 : i32
    return %arg0, %c0_i32, %c0_i32_0 : i32, i32, i32
  }
}

</mosaic_0001>

<llo_original>
// kernel: tpu_custom_call.1
$region0: #{tpu_custom_call.1}
  #allocation0 [shape = 'u32[]', space=smem, size = 0x4, offset = 0x4, fixed_abs, tag = 'smem constant byte address 0x4 - core index']
  #allocation1 [shape = 'u32[144,128]{1,0:T(1,128)}', space=vmem, size = 0x12000, scoped, tag = 'internal scratch']
  #allocation2 [shape = 'f32[1,8]{1,0:T(1,128)}', space=vmem, size = 0x200, scoped, tag = 'scratch operand']
  %s0 = inlined_call_operand.vmem [shape: f32[2,256,8], index: 0, kind: input, shape index: {}]
  %s1 = inlined_call_operand.vmem [shape: f32[8,2], index: 1, kind: input, shape index: {}]
  %s2 = inlined_call_operand.vmem [shape: f32[1,2], index: 2, kind: input, shape index: {}]
  %s3 = inlined_call_operand.vmem [shape: f32[2,72], index: 3, kind: input, shape index: {}]
  %s4 = inlined_call_operand.vmem [shape: f32[1,72], index: 4, kind: input, shape index: {}]
  %s5 = inlined_call_operand.hbm [shape: f32[2,1,72], index: 5, kind: output, shape index: {}]
  %s6 = sld [smem:[#allocation0]]
  $region61: #{tpu_custom_call.1} parent=0
    _
  %s8 = ssub.s32 1, %s6
  %s9 = scalar_select 0, %s8, %s6
  $region1: #{tpu_custom_call.1} parent=0
    #allocation3 [shape = 'u8[1024]{0}', space=vmem, size = 0x400, scoped, tag = 'output window, operand 0']
    #allocation4 [shape = 's32[2]{0}', space=sflag, size = 0x8, scoped, tag = 'scoped memory for tpu_custom_call.1']
    %10 = vsyncpa [#allocation4], 0
    %s11 = scalar_lea.sflag [#allocation4], 1
    %12 = vsyncpa %s11, 0
    loop: start=0, step=1, limit=4
    $region2: #{tpu_custom_call.1} parent=1 // loop_pre_header
      _
    $region3: #{tpu_custom_call.1} parent=1 // loop_header
      %s14 = sphi 0, %s18
      %p15 = scmp.ge.s32.totalorder %s14, 4
      %s21 = sphi 0, %s33
      %s22 = sphi 0, %s29
      %s23 = sphi 0, %s21
      %s24 = sphi 0, %s22
      %s25 = sphi 0, %s23
      %s26 = sphi 0, %s24
      %s38 = sphi 0, %s40
      %s41 = sphi 0, %s38
      %s42 = sphi 0, %s41
      %s58 = sphi 0, %s42
      %s62 = sphi 0, %s62
      %s64 = sphi 0, %s62
      %s65 = sphi 0, %s64
      %s79 = sphi 0, %s65
      %s83 = sphi 0, %s83
      %s85 = sphi 0, %s83
      %s86 = sphi 0, %s85
      %s100 = sphi 0, %s86
      %s104 = sphi 0, %s104
      %s106 = sphi 0, %s104
      %s107 = sphi 0, %s106
      %s121 = sphi 0, %s107
      %s125 = sphi 0, %s125
      %s127 = sphi 0, %s125
      %s128 = sphi 0, %s127
      %s142 = sphi 0, %s128
      %s148 = sphi 0, %s150
      %s151 = sphi 0, %s148
      %s152 = sphi 0, %s151
      %s168 = sphi 0, %s152
    $region4: #{tpu_custom_call.1} parent=1 // loop_header_branch
      %17 = sbr.rel (%p15) target = $region8
    $region5: #{tpu_custom_call.1} parent=1 // loop_body
      %s19 = ssub.s32 %s14, 1
      %s20 = ssub.s32 %s14, 2
      %s27 = sadd.s32 1, %s22
      %p28 = scmp.ge.s32.totalorder %s27, 1
      %s29 = scalar_select %p28, 0, %s27
      %s30 = sadd.s32 1, %s21
      %s31 = scalar_select %p28, %s30, %s21
      %p32 = scmp.ge.s32.totalorder %s31, 2
      %s33 = scalar_select %p32, 0, %s31
      %s34 = ssub.s32 %s21, %s33
      %s35 = ssub.s32 %s22, %s29
      %s36 = sor.u32 %s34, %s35
      %p37 = scmp.eq.s32.totalorder %s36, 0
      %s39 = sadd.s32 %s38, 1
      %s40 = scalar_select %p37, %s38, %s39
      %p43 = pneg %p37
      %p44 = scmp.eq.s32.totalorder %s14, 1
      %p45 = por %p43, %p44
      %p46 = scmp.ne.s32.totalorder %s38, %s41
      %p47 = scmp.eq.s32.totalorder %s14, 0
      %p48 = por %p46, %p47
      %p49 = scmp.ne.s32.totalorder %s38, %s41
      %p50 = scmp.eq.s32.totalorder %s19, 1
      %p51 = por %p49, %p50
      %p52 = scmp.ne.s32.totalorder %s41, %s42
      %p53 = scmp.eq.s32.totalorder %s19, 0
      %p54 = por %p52, %p53
      %p55 = scmp.ne.s32.totalorder %s41, %s42
      %p56 = scmp.eq.s32.totalorder %s20, 1
      %p57 = por %p55, %p56
      %p59 = scmp.ne.s32.totalorder %s42, %s58
      %p60 = scmp.eq.s32.totalorder %s20, 0
      %p61 = por %p59, %p60
      %s63 = sadd.s32 %s62, 1
      %p66 = scmp.eq.s32.totalorder %s14, 1
      %p67 = scmp.ne.s32.totalorder %s62, %s64
      %p68 = scmp.eq.s32.totalorder %s14, 0
      %p69 = por %p67, %p68
      %p70 = scmp.ne.s32.totalorder %s62, %s64
      %p71 = scmp.eq.s32.totalorder %s19, 1
      %p72 = por %p70, %p71
      %p73 = scmp.ne.s32.totalorder %s64, %s65
      %p74 = scmp.eq.s32.totalorder %s19, 0
      %p75 = por %p73, %p74
      %p76 = scmp.ne.s32.totalorder %s64, %s65
      %p77 = scmp.eq.s32.totalorder %s20, 1
      %p78 = por %p76, %p77
      %p80 = scmp.ne.s32.totalorder %s65, %s79
      %p81 = scmp.eq.s32.totalorder %s20, 0
      %p82 = por %p80, %p81
      %s84 = sadd.s32 %s83, 1
      %p87 = scmp.eq.s32.totalorder %s14, 1
      %p88 = scmp.ne.s32.totalorder %s83, %s85
      %p89 = scmp.eq.s32.totalorder %s14, 0
      %p90 = por %p88, %p89
      %p91 = scmp.ne.s32.totalorder %s83, %s85
      %p92 = scmp.eq.s32.totalorder %s19, 1
      %p93 = por %p91, %p92
      %p94 = scmp.ne.s32.totalorder %s85, %s86
      %p95 = scmp.eq.s32.totalorder %s19, 0
      %p96 = por %p94, %p95
      %p97 = scmp.ne.s32.totalorder %s85, %s86
      %p98 = scmp.eq.s32.totalorder %s20, 1
      %p99 = por %p97, %p98
      %p101 = scmp.ne.s32.totalorder %s86, %s100
      %p102 = scmp.eq.s32.totalorder %s20, 0
      %p103 = por %p101, %p102
      %s105 = sadd.s32 %s104, 1
      %p108 = scmp.eq.s32.totalorder %s14, 1
      %p109 = scmp.ne.s32.totalorder %s104, %s106
      %p110 = scmp.eq.s32.totalorder %s14, 0
      %p111 = por %p109, %p110
      %p112 = scmp.ne.s32.totalorder %s104, %s106
      %p113 = scmp.eq.s32.totalorder %s19, 1
      %p114 = por %p112, %p113
      %p115 = scmp.ne.s32.totalorder %s106, %s107
      %p116 = scmp.eq.s32.totalorder %s19, 0
      %p117 = por %p115, %p116
      %p118 = scmp.ne.s32.totalorder %s106, %s107
      %p119 = scmp.eq.s32.totalorder %s20, 1
      %p120 = por %p118, %p119
      %p122 = scmp.ne.s32.totalorder %s107, %s121
      %p123 = scmp.eq.s32.totalorder %s20, 0
      %p124 = por %p122, %p123
      %s126 = sadd.s32 %s125, 1
      %p129 = scmp.eq.s32.totalorder %s14, 1
      %p130 = scmp.ne.s32.totalorder %s125, %s127
      %p131 = scmp.eq.s32.totalorder %s14, 0
      %p132 = por %p130, %p131
      %p133 = scmp.ne.s32.totalorder %s125, %s127
      %p134 = scmp.eq.s32.totalorder %s19, 1
      %p135 = por %p133, %p134
      %p136 = scmp.ne.s32.totalorder %s127, %s128
      %p137 = scmp.eq.s32.totalorder %s19, 0
      %p138 = por %p136, %p137
      %p139 = scmp.ne.s32.totalorder %s127, %s128
      %p140 = scmp.eq.s32.totalorder %s20, 1
      %p141 = por %p139, %p140
      %p143 = scmp.ne.s32.totalorder %s128, %s142
      %p144 = scmp.eq.s32.totalorder %s20, 0
      %p145 = por %p143, %p144
      %s146 = ssub.s32 %s21, %s33
      %p147 = scmp.eq.s32.totalorder %s146, 0
      %s149 = sadd.s32 %s148, 1
      %s150 = scalar_select %p147, %s148, %s149
      %p153 = pneg %p147
      %p154 = scmp.eq.s32.totalorder %s14, 1
      %p155 = por %p153, %p154
      %p156 = scmp.ne.s32.totalorder %s148, %s151
      %p157 = scmp.eq.s32.totalorder %s14, 0
      %p158 = por %p156, %p157
      %p159 = scmp.ne.s32.totalorder %s148, %s151
      %p160 = scmp.eq.s32.totalorder %s19, 1
      %p161 = por %p159, %p160
      %p162 = scmp.ne.s32.totalorder %s151, %s152
      %p163 = scmp.eq.s32.totalorder %s19, 0
      %p164 = por %p162, %p163
      %p165 = scmp.ne.s32.totalorder %s151, %s152
      %p166 = scmp.eq.s32.totalorder %s20, 1
      %p167 = por %p165, %p166
      %p169 = scmp.ne.s32.totalorder %s152, %s168
      %p170 = scmp.eq.s32.totalorder %s20, 0
      %p171 = por %p169, %p170
      %p172 = scmp.le.s32.totalorder 1, %s14
      %p173 = scmp.lt.s32.totalorder %s14, 3
      %p174 = pnand %p172, %p173
      %p175 = pneg %p174
      // Predicated region
      $region9: #{tpu_custom_call.1} parent=5 // pred_check
        _
      $region10: #{tpu_custom_call.1} parent=5 // pred_check_branch
        %177 = sbr.rel (%p174) target = $region12
      $region11: #{tpu_custom_call.1} parent=5 // pred_region
        %s178 = ssub.s32 %s14, 1
        // Predicated region
        $region13: #{tpu_custom_call.1} parent=11 // pred_check
          %p179 = pneg %p75
        $region14: #{tpu_custom_call.1} parent=11 // pred_check_branch
          %181 = sbr.rel (%p179) target = $region16
        $region15: #{tpu_custom_call.1} parent=11 // pred_region
          _
        $region16: #{tpu_custom_call.1} parent=11 // pred_fallthru
          _
        // Predicated region
        $region17: #{tpu_custom_call.1} parent=11 // pred_check
          %p182 = pneg %p96
        $region18: #{tpu_custom_call.1} parent=11 // pred_check_branch
          %184 = sbr.rel (%p182) target = $region20
        $region19: #{tpu_custom_call.1} parent=11 // pred_region
          _
        $region20: #{tpu_custom_call.1} parent=11 // pred_fallthru
          _
        // Predicated region
        $region21: #{tpu_custom_call.1} parent=11 // pred_check
          %p185 = pneg %p117
        $region22: #{tpu_custom_call.1} parent=11 // pred_check_branch
          %187 = sbr.rel (%p185) target = $region24
        $region23: #{tpu_custom_call.1} parent=11 // pred_region
          _
        $region24: #{tpu_custom_call.1} parent=11 // pred_fallthru
          _
        // Predicated region
        $region25: #{tpu_custom_call.1} parent=11 // pred_check
          %p188 = pneg %p138
        $region26: #{tpu_custom_call.1} parent=11 // pred_check_branch
          %190 = sbr.rel (%p188) target = $region28
        $region27: #{tpu_custom_call.1} parent=11 // pred_region
          _
        $region28: #{tpu_custom_call.1} parent=11 // pred_fallthru
          _
      $region12: #{tpu_custom_call.1} parent=5 // pred_fallthru
        _
      %p191 = scmp.lt.s32.totalorder %s14, 2
      // Predicated region
      $region29: #{tpu_custom_call.1} parent=5 // pred_check
        %p192 = pneg %p191
      $region30: #{tpu_custom_call.1} parent=5 // pred_check_branch
        %194 = sbr.rel (%p192) target = $region32
      $region31: #{tpu_custom_call.1} parent=5 // pred_region
        // Predicated region
        $region33: #{tpu_custom_call.1} parent=31 // pred_check
          %p195 = pneg %p48
        $region34: #{tpu_custom_call.1} parent=31 // pred_check_branch
          %197 = sbr.rel (%p195) target = $region36
        $region35: #{tpu_custom_call.1} parent=31 // pred_region
          %s198 = smul.u32 32, %s22
          %p199 = scmp.lt.s32.totalorder %s21, 1
          %s200 = scalar_select %p199, %s21, 1
          %p201 = scmp.lt.s32.totalorder %s198, 31
          %s202 = scalar_select %p201, %s198, 31
          %s203 = smul.addr %s200, 32
          %s204 = sadd.s32 %s202, %s203
          %s205 = smul.addr %s204, 8
          %s206 = scalar_lea.vmem %s0, %s205
          %s207 = smul.u32 32, %s22
        $region36: #{tpu_custom_call.1} parent=31 // pred_fallthru
          _
      $region32: #{tpu_custom_call.1} parent=5 // pred_fallthru
        _
      %p208 = scmp.le.s32.totalorder 1, %s14
      %p209 = scmp.lt.s32.totalorder %s14, 3
      %p210 = pnand %p208, %p209
      %p211 = pneg %p210
      // Predicated region
      $region37: #{tpu_custom_call.1} parent=5 // pred_check
        _
      $region38: #{tpu_custom_call.1} parent=5 // pred_check_branch
        %213 = sbr.rel (%p210) target = $region40
      $region39: #{tpu_custom_call.1} parent=5 // pred_region
        %s214 = ssub.s32 %s14, 1
        %s215 = smul.u32 32, %s24
        %p216 = scmp.lt.s32.totalorder %s23, 1
        %s217 = scalar_select %p216, %s23, 1
        %p218 = scmp.lt.s32.totalorder %s215, 31
        %s219 = scalar_select %p218, %s215, 31
        %s220 = smul.addr %s217, 32
        %s221 = sadd.s32 %s219, %s220
        %s222 = smul.addr %s221, 8
        %s223 = scalar_lea.vmem %s0, %s222
        %p224 = pneg %p54
        %p225 = pneg %p51
        %p226 = pneg %p75
        %p227 = pneg %p72
        %p228 = pneg %p96
        %p229 = pneg %p93
        %p230 = pneg %p117
        %p231 = pneg %p114
        %p232 = pneg %p138
        %p233 = pneg %p135
        %p234 = pneg %p164
        %p235 = pneg %p161
        %s236 = sand.u32 %s151, 1
        %s237 = scalar_lea.sflag [#allocation4], %s236
        %s238 = sand.u32 %s151, 1
        %s239 = scalar_lea.vmem [#allocation3], %s238
        %s240 = smul.u32 32, %s24
        %p241 = scmp.lt.s32.totalorder %s23, 1
        %s242 = scalar_select %p241, %s23, 1
        %p243 = scmp.lt.s32.totalorder %s240, 31
        %s244 = scalar_select %p243, %s240, 31
        %s245 = smul.addr %s242, 32
        %s246 = sadd.s32 %s244, %s245
        %s247 = smul.addr %s246, 8
        %s248 = scalar_lea.vmem %s0, %s247
        %s249 = smul.u32 32, %s24
        %p250 = scmp.eq.s32.totalorder %s24, 0
        // Predicated region
        $region41: #{tpu_custom_call.1} parent=39 // pred_check
          %p251 = pneg %p250
        $region42: #{tpu_custom_call.1} parent=39 // pred_check_branch
          %253 = sbr.rel (%p251) target = $region44
        $region43: #{tpu_custom_call.1} parent=39 // pred_region
          %vm254 = vcmask 57344
          %255 = vst.msk [vmem:[#allocation2] sm:$0x1] %vm254, 0.0
        $region44: #{tpu_custom_call.1} parent=39 // pred_fallthru
          _
        %v256 = vld [vmem:[%s248] sm:$0xff]
        %v257 = vld [vmem:[%s248 + $0x8] sm:$0xff]
        %v258 = vld [vmem:[%s248 + $0x10] sm:$0xff]
        %v259 = vld [vmem:[%s248 + $0x18] sm:$0xff]
        %v260 = vld [vmem:[%s248 + $0x20] sm:$0xff]
        %v261 = vld [vmem:[%s248 + $0x28] sm:$0xff]
        %v262 = vld [vmem:[%s248 + $0x30] sm:$0xff]
        %v263 = vld [vmem:[%s248 + $0x38] sm:$0xff]
        %v264 = vld [vmem:[%s248 + $0x40] sm:$0xff]
        %v265 = vld [vmem:[%s248 + $0x48] sm:$0xff]
        %v266 = vld [vmem:[%s248 + $0x50] sm:$0xff]
        %v267 = vld [vmem:[%s248 + $0x58] sm:$0xff]
        %v268 = vld [vmem:[%s248 + $0x60] sm:$0xff]
        %v269 = vld [vmem:[%s248 + $0x68] sm:$0xff]
        %v270 = vld [vmem:[%s248 + $0x70] sm:$0xff]
        %v271 = vld [vmem:[%s248 + $0x78] sm:$0xff]
        %v272 = vld [vmem:[%s248 + $0x80] sm:$0xff]
        %v273 = vld [vmem:[%s248 + $0x88] sm:$0xff]
        %v274 = vld [vmem:[%s248 + $0x90] sm:$0xff]
        %v275 = vld [vmem:[%s248 + $0x98] sm:$0xff]
        %v276 = vld [vmem:[%s248 + $0xa0] sm:$0xff]
        %v277 = vld [vmem:[%s248 + $0xa8] sm:$0xff]
        %v278 = vld [vmem:[%s248 + $0xb0] sm:$0xff]
        %v279 = vld [vmem:[%s248 + $0xb8] sm:$0xff]
        %v280 = vld [vmem:[%s248 + $0xc0] sm:$0xff]
        %v281 = vld [vmem:[%s248 + $0xc8] sm:$0xff]
        %v282 = vld [vmem:[%s248 + $0xd0] sm:$0xff]
        %v283 = vld [vmem:[%s248 + $0xd8] sm:$0xff]
        %v284 = vld [vmem:[%s248 + $0xe0] sm:$0xff]
        %v285 = vld [vmem:[%s248 + $0xe8] sm:$0xff]
        %v286 = vld [vmem:[%s248 + $0xf0] sm:$0xff]
        %v287 = vld [vmem:[%s248 + $0xf8] sm:$0xff]
        %v288 = vld [vmem:[#allocation2] sm:$0x1]
        %vm289 = vcmask 64512
        %v290 = vsel %vm289, %v256, 0.0
        %v291 = vsel %vm289, %v257, 0.0
        %v292 = vadd.f32 %v290, %v291
        %v293 = vsel %vm289, %v258, 0.0
        %v294 = vadd.f32 %v292, %v293
        %v295 = vsel %vm289, %v259, 0.0
        %v296 = vadd.f32 %v294, %v295
        %v297 = vsel %vm289, %v260, 0.0
        %v298 = vadd.f32 %v296, %v297
        %v299 = vsel %vm289, %v261, 0.0
        %v300 = vadd.f32 %v298, %v299
        %v301 = vsel %vm289, %v262, 0.0
        %v302 = vadd.f32 %v300, %v301
        %v303 = vsel %vm289, %v263, 0.0
        %v304 = vadd.f32 %v302, %v303
        %v305 = vsel %vm289, %v264, 0.0
        %v306 = vadd.f32 %v304, %v305
        %v307 = vsel %vm289, %v265, 0.0
        %v308 = vadd.f32 %v306, %v307
        %v309 = vsel %vm289, %v266, 0.0
        %v310 = vadd.f32 %v308, %v309
        %v311 = vsel %vm289, %v267, 0.0
        %v312 = vadd.f32 %v310, %v311
        %v313 = vsel %vm289, %v268, 0.0
        %v314 = vadd.f32 %v312, %v313
        %v315 = vsel %vm289, %v269, 0.0
        %v316 = vadd.f32 %v314, %v315
        %v317 = vsel %vm289, %v270, 0.0
        %v318 = vadd.f32 %v316, %v317
        %v319 = vsel %vm289, %v271, 0.0
        %v320 = vadd.f32 %v318, %v319
        %v321 = vsel %vm289, %v272, 0.0
        %v322 = vadd.f32 %v320, %v321
        %v323 = vsel %vm289, %v273, 0.0
        %v324 = vadd.f32 %v322, %v323
        %v325 = vsel %vm289, %v274, 0.0
        %v326 = vadd.f32 %v324, %v325
        %v327 = vsel %vm289, %v275, 0.0
        %v328 = vadd.f32 %v326, %v327
        %v329 = vsel %vm289, %v276, 0.0
        %v330 = vadd.f32 %v328, %v329
        %v331 = vsel %vm289, %v277, 0.0
        %v332 = vadd.f32 %v330, %v331
        %v333 = vsel %vm289, %v278, 0.0
        %v334 = vadd.f32 %v332, %v333
        %v335 = vsel %vm289, %v279, 0.0
        %v336 = vadd.f32 %v334, %v335
        %v337 = vsel %vm289, %v280, 0.0
        %v338 = vadd.f32 %v336, %v337
        %v339 = vsel %vm289, %v281, 0.0
        %v340 = vadd.f32 %v338, %v339
        %v341 = vsel %vm289, %v282, 0.0
        %v342 = vadd.f32 %v340, %v341
        %v343 = vsel %vm289, %v283, 0.0
        %v344 = vadd.f32 %v342, %v343
        %v345 = vsel %vm289, %v284, 0.0
        %v346 = vadd.f32 %v344, %v345
        %v347 = vsel %vm289, %v285, 0.0
        %v348 = vadd.f32 %v346, %v347
        %v349 = vsel %vm289, %v286, 0.0
        %v350 = vadd.f32 %v348, %v349
        %v351 = vsel %vm289, %v287, 0.0
        %v352 = vadd.f32 %v350, %v351
        %v353 = vrot.slane %v352, 4
        %v354 = vadd.f32 %v352, %v353
        %v355 = vrot.slane %v354, 2
        %v356 = vadd.f32 %v354, %v355
        %v357 = vrot.slane %v356, 1
        %v358 = vadd.f32 %v356, %v357
        %v359 = vadd.f32 %v288, %v358
        %vm360 = vcmask 57344
        %361 = vst.msk [vmem:[#allocation2] sm:$0x1] %vm360, %v359
        // Predicated region
        $region45: #{tpu_custom_call.1} parent=39 // pred_check
          %p362 = pneg %p250
        $region46: #{tpu_custom_call.1} parent=39 // pred_check_branch
          %364 = sbr.rel (%p362) target = $region48
        $region47: #{tpu_custom_call.1} parent=39 // pred_region
          %v365 = vld [vmem:[#allocation2] sm:$0x1]
          %v366 = vmul.f32 %v365, 0.00390625
          %v367 = vld [vmem:[%s1] sm:$0xff]
          %v368 = vld [vmem:[%s2] sm:$0x1]
          %v370 = vsel %vm289, %v366, 0
          %372 = vmatprep.subr.mxu0 0.0
          %373 = vmatpush1.msra.mxu0 %v367
          %374 = vmatprep.subr.mxu0 0.0
          %375 = vmatpush1.msra.mxu0 0.0
          %376 = vmatprep.subr.mxu0 0.0
          %377 = vmatpush1.msra.mxu0 0.0
          %378 = vmatprep.subr.mxu0 0.0
          %379 = vmatpush1.msra.mxu0 0.0
          %380 = vmatprep.subr.mxu0 0.0
          %381 = vmatpush1.msra.mxu0 0.0
          %382 = vmatprep.subr.mxu0 0.0
          %383 = vmatpush1.msra.mxu0 0.0
          %384 = vmatprep.subr.mxu0 0.0
          %385 = vmatpush1.msra.mxu0 0.0
          %386 = vmatprep.subr.mxu0 0.0
          %387 = vmatpush1.msra.mxu0 0.0
          %388 = vmatprep.subr.mxu0 0.0
          %389 = vmatpush1.msra.mxu0 0.0
          %390 = vmatprep.subr.mxu0 0.0
          %391 = vmatpush1.msra.mxu0 0.0
          %392 = vmatprep.subr.mxu0 0.0
          %393 = vmatpush1.msra.mxu0 0.0
          %394 = vmatprep.subr.mxu0 0.0
          %395 = vmatpush1.msra.mxu0 0.0
          %396 = vmatprep.subr.mxu0 0.0
          %397 = vmatpush1.msra.mxu0 0.0
          %398 = vmatprep.subr.mxu0 0.0
          %399 = vmatpush1.msra.mxu0 0.0
          %400 = vmatprep.subr.mxu0 0.0
          %401 = vmatpush1.msra.mxu0 0.0
          %402 = vmatprep.subr.mxu0 0.0
          %403 = vmatpush1.msra.mxu0 0.0
          %404 = vmatprep.subr.mxu0 0.0
          %405 = vmatpush1.msra.mxu0 0.0
          %406 = vmatprep.subr.mxu0 0.0
          %407 = vmatpush1.msra.mxu0 0.0
          %408 = vmatprep.subr.mxu0 0.0
          %409 = vmatpush1.msra.mxu0 0.0
          %410 = vmatprep.subr.mxu0 0.0
          %411 = vmatpush1.msra.mxu0 0.0
          %412 = vmatprep.subr.mxu0 0.0
          %413 = vmatpush1.msra.mxu0 0.0
          %414 = vmatprep.subr.mxu0 0.0
          %415 = vmatpush1.msra.mxu0 0.0
          %416 = vmatprep.subr.mxu0 0.0
          %417 = vmatpush1.msra.mxu0 0.0
          %418 = vmatprep.subr.mxu0 0.0
          %419 = vmatpush1.msra.mxu0 0.0
          %420 = vmatprep.subr.mxu0 0.0
          %421 = vmatpush1.msra.mxu0 0.0
          %422 = vmatprep.subr.mxu0 0.0
          %423 = vmatpush1.msra.mxu0 0.0
          %424 = vmatprep.subr.mxu0 0.0
          %425 = vmatpush1.msra.mxu0 0.0
          %426 = vmatprep.subr.mxu0 0.0
          %427 = vmatpush1.msra.mxu0 0.0
          %428 = vmatprep.subr.mxu0 0.0
          %429 = vmatpush1.msra.mxu0 0.0
          %430 = vmatprep.subr.mxu0 0.0
          %431 = vmatpush1.msra.mxu0 0.0
          %432 = vmatprep.subr.mxu0 0.0
          %433 = vmatpush1.msra.mxu0 0.0
          %434 = vmatprep.subr.mxu0 0.0
          %435 = vmatpush1.msra.mxu0 0.0
          %436 = vmatprep.mubr.f32.mxu0 0.0
          %437 = vmatmul.mubr.f32.gmra.mrb[0].mxu0 %v370
          %v438 = vpop.f32.mrb[0].mxu0
          %v439 = vadd.f32 %v368, %v438
          %v440 = vpop.f32.mrb[0].mxu0
          %441 = vdwg.mxu0
          %v442 = vmax.f32 %v439, 0.0
          %v443 = vld [vmem:[%s3] sm:$0x3]
          %v444 = vld [vmem:[%s4] sm:$0x1]
          %vm445 = vcmask 15360
          %v447 = vsel %vm445, %v442, 0
          %vm449 = vcmask 1041408
          %v451 = vsel %vm449, %v443, 0
          %453 = vmatprep.subr.mxu0 0.0
          %454 = vmatpush1.msra.mxu0 %v451
          %455 = vmatprep.subr.mxu0 0.0
          %456 = vmatpush1.msra.mxu0 0.0
          %457 = vmatprep.subr.mxu0 0.0
          %458 = vmatpush1.msra.mxu0 0.0
          %459 = vmatprep.subr.mxu0 0.0
          %460 = vmatpush1.msra.mxu0 0.0
          %461 = vmatprep.subr.mxu0 0.0
          %462 = vmatpush1.msra.mxu0 0.0
          %463 = vmatprep.subr.mxu0 0.0
          %464 = vmatpush1.msra.mxu0 0.0
          %465 = vmatprep.subr.mxu0 0.0
          %466 = vmatpush1.msra.mxu0 0.0
          %467 = vmatprep.subr.mxu0 0.0
          %468 = vmatpush1.msra.mxu0 0.0
          %469 = vmatprep.subr.mxu0 0.0
          %470 = vmatpush1.msra.mxu0 0.0
          %471 = vmatprep.subr.mxu0 0.0
          %472 = vmatpush1.msra.mxu0 0.0
          %473 = vmatprep.subr.mxu0 0.0
          %474 = vmatpush1.msra.mxu0 0.0
          %475 = vmatprep.subr.mxu0 0.0
          %476 = vmatpush1.msra.mxu0 0.0
          %477 = vmatprep.subr.mxu0 0.0
          %478 = vmatpush1.msra.mxu0 0.0
          %479 = vmatprep.subr.mxu0 0.0
          %480 = vmatpush1.msra.mxu0 0.0
          %481 = vmatprep.subr.mxu0 0.0
          %482 = vmatpush1.msra.mxu0 0.0
          %483 = vmatprep.subr.mxu0 0.0
          %484 = vmatpush1.msra.mxu0 0.0
          %485 = vmatprep.subr.mxu0 0.0
          %486 = vmatpush1.msra.mxu0 0.0
          %487 = vmatprep.subr.mxu0 0.0
          %488 = vmatpush1.msra.mxu0 0.0
          %489 = vmatprep.subr.mxu0 0.0
          %490 = vmatpush1.msra.mxu0 0.0
          %491 = vmatprep.subr.mxu0 0.0
          %492 = vmatpush1.msra.mxu0 0.0
          %493 = vmatprep.subr.mxu0 0.0
          %494 = vmatpush1.msra.mxu0 0.0
          %495 = vmatprep.subr.mxu0 0.0
          %496 = vmatpush1.msra.mxu0 0.0
          %497 = vmatprep.subr.mxu0 0.0
          %498 = vmatpush1.msra.mxu0 0.0
          %499 = vmatprep.subr.mxu0 0.0
          %500 = vmatpush1.msra.mxu0 0.0
          %501 = vmatprep.subr.mxu0 0.0
          %502 = vmatpush1.msra.mxu0 0.0
          %503 = vmatprep.subr.mxu0 0.0
          %504 = vmatpush1.msra.mxu0 0.0
          %505 = vmatprep.subr.mxu0 0.0
          %506 = vmatpush1.msra.mxu0 0.0
          %507 = vmatprep.subr.mxu0 0.0
          %508 = vmatpush1.msra.mxu0 0.0
          %509 = vmatprep.subr.mxu0 0.0
          %510 = vmatpush1.msra.mxu0 0.0
          %511 = vmatprep.subr.mxu0 0.0
          %512 = vmatpush1.msra.mxu0 0.0
          %513 = vmatprep.subr.mxu0 0.0
          %514 = vmatpush1.msra.mxu0 0.0
          %515 = vmatprep.subr.mxu0 0.0
          %516 = vmatpush1.msra.mxu0 0.0
          %517 = vmatprep.mubr.f32.mxu0 0.0
          %518 = vmatmul.mubr.f32.gmra.mrb[0].mxu0 %v447
          %v519 = vpop.f32.mrb[0].mxu0
          %v520 = vadd.f32 %v444, %v519
          %v521 = vpop.f32.mrb[0].mxu0
          %522 = vdwg.mxu0
          %vm523 = vcmask 581632
          %524 = vst.msk [vmem:[%s239] sm:$0x1] %vm523, %v520
        $region48: #{tpu_custom_call.1} parent=39 // pred_fallthru
          _
        %s525 = sand.u32 %s151, 1
        %s526 = scalar_lea.sflag [#allocation4], %s525
        %s527 = sand.u32 %s151, 1
        %s528 = scalar_lea.vmem [#allocation3], %s527
        // Predicated region
        $region49: #{tpu_custom_call.1} parent=39 // pred_check
          %p529 = pneg %p161
        $region50: #{tpu_custom_call.1} parent=39 // pred_check_branch
          %531 = sbr.rel (%p529) target = $region52
        $region51: #{tpu_custom_call.1} parent=39 // pred_region
          %s533 = ssub.s32 16, 16
          %534 = vsyncadd %s526, %s533
          %s535 = smul.addr %s23, 16
          %s536 = scalar_lea.hbm %s5, %s535
          %s538 = sshll.u32 %s528, 4
          %s539 = int_to_ptr.vmem [resolvable:$true] %s538
          %541 = dma.vmem_to_hbm [thread:$0]  %s539, 16, %s536, %s526
        $region52: #{tpu_custom_call.1} parent=39 // pred_fallthru
          _
      $region40: #{tpu_custom_call.1} parent=5 // pred_fallthru
        _
      %p542 = scmp.le.s32.totalorder 2, %s14
      // Predicated region
      $region53: #{tpu_custom_call.1} parent=5 // pred_check
        %p543 = pneg %p542
      $region54: #{tpu_custom_call.1} parent=5 // pred_check_branch
        %545 = sbr.rel (%p543) target = $region56
      $region55: #{tpu_custom_call.1} parent=5 // pred_region
        %s546 = ssub.s32 %s14, 2
        // Predicated region
        $region57: #{tpu_custom_call.1} parent=55 // pred_check
          %p547 = pneg %p167
        $region58: #{tpu_custom_call.1} parent=55 // pred_check_branch
          %549 = sbr.rel (%p547) target = $region60
        $region59: #{tpu_custom_call.1} parent=55 // pred_region
          %s550 = sand.u32 %s152, 1
          %s551 = scalar_lea.sflag [#allocation4], %s550
          %s552 = sand.u32 %s152, 1
          %s553 = scalar_lea.vmem [#allocation3], %s552
          %554 = dma.done %s551, 16
        $region60: #{tpu_custom_call.1} parent=55 // pred_fallthru
          _
      $region56: #{tpu_custom_call.1} parent=5 // pred_fallthru
        _
    $region6: #{tpu_custom_call.1} parent=1 // loop_footer
      %s18 = sadd.s32 1, %s14
    $region7: #{tpu_custom_call.1} parent=1 // loop_footer_branch
      %13 = sbr.rel target = $region3
    $region8: #{tpu_custom_call.1} parent=1 // loop_exit
      _
    %555 = vsyncpa [#allocation4], 1
    %s556 = scalar_lea.sflag [#allocation4], 1
    %557 = vsyncpa %s556, 1

</llo_original>
